<compile_context>
chip_gen: v6e
topology: v6e:2x2x1
jax: 0.10.0
libtpu: 0.0.40
codegen_flags: <defaults>
</compile_context>

<pallas_src>
import functools

import jax
import jax.numpy as jnp
from jax.experimental import pallas as pl
from jax.experimental.pallas import tpu as pltpu

_MIB = 1024 * 1024


def _round_up(a: int, b: int) -> int:
    return (a + b - 1) // b * b


def _default_vmem_budget():
    """(per-input-tile byte budget, kernel vmem_limit_bytes) per generation."""
    try:
        cap = pltpu.get_tpu_info().vmem_capacity_bytes
    except Exception:
        cap = 64 * _MIB
    if cap >= 128 * _MIB:              # v5e / v6e: 128 MiB VMEM
        return 16 * _MIB, 96 * _MIB
    return 8 * _MIB, 32 * _MIB         # v7x (64 MiB VMEM) or unknown


def _choose_row_tile(nc: int) -> int:
    """Row tile: multiple of 128 (lane-dense output block), <= 1024 rows; aim
    for >= 2 row tiles so v7x's two TensorCores both get 'parallel' work."""
    if nc >= 2048:
        cand = 1024
    else:
        cand = max(128, _round_up((nc + 1) // 2, 128))
    # Never let a block exceed the array dim: fall back to the full (possibly
    # ragged) extent, which is always a legal block shape.
    return nc if cand >= nc else cand


def _choose_spatial_tile(tr: int, hw: int, itemsize: int, tile_bytes: int) -> int:
    """Full H*W if it fits the per-buffer budget, else a 128-lane multiple."""
    if tr * hw * itemsize <= tile_bytes:
        return hw
    return max(128, (tile_bytes // (tr * itemsize)) // 128 * 128)


def _int_pow(x, n: int):
    """x**n (integer n >= 1) by exponentiation-by-squaring — VPU only."""
    acc = None
    base = x
    while n:
        if n & 1:
            acc = base if acc is None else acc * base
        n >>= 1
        if n:
            base = base * base
    return acc


def _gem_kernel(p_ref, x_ref, o_ref, acc_ref, *, eps, hw, thw, n_hw_tiles,
                p_static, mask_last_tile, pow_dtype):
    # p_ref: (1,1) f32 scalar in SMEM.   x_ref: (TR, THW) input tile.
    # o_ref: (1, TR) lane-dense output block.  acc_ref: (8, TR) f32 scratch.
    k = pl.program_id(1)

    @pl.when(k == 0)
    def _init():
        acc_ref[...] = jnp.zeros_like(acc_ref)

    ones = jnp.ones((8, x_ref.shape[-1]), jnp.float32)

    def accumulate(mask_tail: bool):
        x = x_ref[...].astype(jnp.float32)
        xc = jnp.maximum(x, eps)                      # clamp(min=eps) -> > 0
        if p_static is not None:
            xp = _int_pow(xc, int(p_static))          # VPU-only pow
        else:
            # xc ** p == exp(p * log(xc)); optionally in bf16 to relieve the
            # single EUP slot (v6e/v7x only — v5e has no bf16 EUP).
            xl = xc.astype(pow_dtype)
            xp = jnp.exp(p_ref[0, 0].astype(pow_dtype) * jnp.log(xl))
            xp = xp.astype(jnp.float32)
        if mask_tail:
            # NaN-safe select: the out-of-bounds lanes of the last spatial
            # tile may hold garbage (no wrapper padding anymore).
            lane = jax.lax.broadcasted_iota(jnp.int32, xp.shape, 1)
            xp = jnp.where(k * thw + lane < hw, xp, 0.0)
        # Row-sum over the lane axis as an MXU NT matmul:
        #   ones(8, THW) @ xp(TR, THW)^T -> (8, TR) lane-dense partial sums.
        acc_ref[...] += jax.lax.dot_general(
            ones, xp, (((1,), (1,)), ((), ())),
            preferred_element_type=jnp.float32)

    if not mask_last_tile:
        accumulate(False)
    elif n_hw_tiles == 1:
        accumulate(True)
    else:
        # Only the last spatial tile pays the iota/compare/select.
        @pl.when(k != n_hw_tiles - 1)
        def _body():
            accumulate(False)

        @pl.when(k == n_hw_tiles - 1)
        def _tail():
            accumulate(True)

    @pl.when(k == pl.num_programs(1) - 1)
    def _finalize():
        m = acc_ref[0:1, :] * (1.0 / hw)              # true mean over H*W
        if p_static is not None:
            y = jnp.exp(jnp.log(m) * (1.0 / float(p_static)))
        else:
            y = jnp.exp(jnp.log(m) / p_ref[0, 0])     # mean ** (1/p)
        o_ref[...] = y.astype(o_ref.dtype)            # wide lane-dense store


def gem_pallas(x: jax.Array, p, eps: float = 1e-6, *, static_p=None,
               tile_bytes=None, vmem_limit_bytes=None,
               pow_dtype=jnp.float32) -> jax.Array:
    """GeM pooling. x: (N, C, H, W); p: runtime scalar (learnable). Pass
    static_p=<int> to specialise an integer exponent at trace time.
    Returns (N, C, 1, 1)."""
    assert static_p is None or (int(static_p) == static_p and static_p >= 1)
    N, C, H, W = x.shape
    NC, HW = N * C, H * W
    x2 = x.reshape(NC, HW)                 # layout-preserving reshape, no copy

    default_tile, default_limit = _default_vmem_budget()
    if tile_bytes is None:
        tile_bytes = default_tile
    if vmem_limit_bytes is None:
        vmem_limit_bytes = default_limit

    itemsize = jnp.dtype(x.dtype).itemsize
    TR = _choose_row_tile(NC)
    THW = _choose_spatial_tile(TR, HW, itemsize, tile_bytes)
    G_r = pl.cdiv(NC, TR)
    G_hw = pl.cdiv(HW, THW)
    mask_last_tile = (HW % THW) != 0

    p_arr = jnp.asarray(p, jnp.float32).reshape(1, 1)

    kernel = functools.partial(
        _gem_kernel, eps=float(eps), hw=HW, thw=THW, n_hw_tiles=G_hw,
        p_static=static_p, mask_last_tile=mask_last_tile, pow_dtype=pow_dtype)

    cost = pl.CostEstimate(
        flops=20 * NC * HW,   # ~16 MXU flops/elem (8-row ones matmul) + VPU
        transcendentals=(0 if static_p is not None else 2 * NC * HW) + 2 * NC,
        bytes_accessed=NC * HW * itemsize + NC * itemsize,
    )

    out = pl.pallas_call(
        kernel,
        out_shape=jax.ShapeDtypeStruct((1, NC), x.dtype),
        grid=(G_r, G_hw),
        in_specs=[
            pl.BlockSpec(memory_space=pltpu.MemorySpace.SMEM),   # p (1,1)
            pl.BlockSpec((TR, THW), lambda i, k: (i, k)),        # x tiles
        ],
        out_specs=pl.BlockSpec((1, TR), lambda i, k: (0, i)),    # lane-dense
        scratch_shapes=[pltpu.VMEM((8, TR), jnp.float32)],       # partial sums
        compiler_params=pltpu.CompilerParams(
            dimension_semantics=("parallel", "arbitrary"),
            vmem_limit_bytes=int(vmem_limit_bytes)),
        cost_estimate=cost,
    )(p_arr, x2)

    return out.reshape(N, C, 1, 1)


def gem_reference(x: jax.Array, p, eps: float = 1e-6) -> jax.Array:
    xc = jnp.maximum(x, eps)
    m = jnp.mean(xc ** p, axis=(2, 3), keepdims=True)
    return m ** (1.0 / p)


if __name__ == "__main__":
    k1, k2, k3 = jax.random.split(jax.random.PRNGKey(0), 3)
    eps = 1e-6
    p = jnp.float32(3.0)   # matches nn.Parameter(torch.ones(1) * 3.0)

    # Case 1: dynamic (learnable) p, small NC -> single full-extent row tile,
    # full-H*W spatial tile, no padding anywhere.
    x1 = jax.random.normal(k1, (2, 4, 16, 16), dtype=jnp.float32)
    y1 = gem_pallas(x1, p, eps)
    jax.block_until_ready(y1)
    r1 = gem_reference(x1, p, eps)
    assert y1.shape == (2, 4, 1, 1)
    assert jnp.allclose(y1, r1, rtol=2e-4, atol=1e-5), (
        f"case1 max abs err = {jnp.max(jnp.abs(y1 - r1))}")

    # Case 2: ragged H*W (17*17 = 289) with a tiny VMEM budget to force the
    # tiled "arbitrary" spatial axis + gated last-tile lane masking.
    x2 = jax.random.normal(k2, (2, 64, 17, 17), dtype=jnp.float32)
    y2 = gem_pallas(x2, p, eps, tile_bytes=32 * 1024)
    jax.block_until_ready(y2)
    r2 = gem_reference(x2, p, eps)
    assert y2.shape == (2, 64, 1, 1)
    assert jnp.allclose(y2, r2, rtol=2e-4, atol=1e-5), (
        f"case2 max abs err = {jnp.max(jnp.abs(y2 - r2))}")

    # Case 3: multiple row tiles with a ragged (partial) last row tile
    # (NC = 320, TR = 256) — exercises the pad-free row path.
    x3 = jax.random.normal(k3, (2, 160, 8, 8), dtype=jnp.float32)
    y3 = gem_pallas(x3, p, eps)
    jax.block_until_ready(y3)
    r3 = gem_reference(x3, p, eps)
    assert y3.shape == (2, 160, 1, 1)
    assert jnp.allclose(y3, r3, rtol=2e-4, atol=1e-5), (
        f"case3 max abs err = {jnp.max(jnp.abs(y3 - r3))}")

    # Case 4: static integer-p specialisation (exponentiation-by-squaring,
    # no per-element transcendentals).
    y4 = gem_pallas(x1, p, eps, static_p=3)
    jax.block_until_ready(y4)
    assert jnp.allclose(y4, r1, rtol=2e-4, atol=1e-5), (
        f"case4 max abs err = {jnp.max(jnp.abs(y4 - r1))}")

    print("KERNEL_OK")
</pallas_src>

<mosaic_0001>
module attributes {stable_mosaic.version = 11 : i64} {
  func.func @_gem_kernel(%arg0: i32, %arg1: i32, %arg2: memref<1x1xf32, #tpu.memory_space<smem>>, %arg3: memref<8x256xf32, #tpu.memory_space<vmem>>, %arg4: memref<1x8xf32, #tpu.memory_space<vmem>>, %arg5: memref<8x8xf32, #tpu.memory_space<vmem>>) attributes {dimension_semantics = [#tpu.dimension_semantics<parallel>, #tpu.dimension_semantics<arbitrary>], iteration_bounds = array<i64: 1, 1>, scalar_prefetch = 0 : i64, scratch_operands = 1 : i64, tpu.core_type = #tpu.core_type<tc>, window_params = [{transform_indices = @transform_0, window_bounds = array<i64: 1, 1>}, {transform_indices = @transform_1, window_bounds = array<i64: 8, 256>}, {transform_indices = @transform_2, window_bounds = array<i64: 1, 8>}]} {
    %c0_i32 = arith.constant 0 : i32
    %0 = arith.cmpi eq, %arg1, %c0_i32 : i32
    %1 = arith.extui %0 : i1 to i32
    %c0_i32_0 = arith.constant 0 : i32
    %2 = arith.cmpi ne, %1, %c0_i32_0 : i32
    scf.if %2 {
      %cst_12 = arith.constant 0.000000e+00 : f32
      %19 = vector.broadcast %cst_12 : f32 to vector<8x8xf32>
      %c0_13 = arith.constant 0 : index
      %c0_14 = arith.constant 0 : index
      %20 = vector.load %arg5[%c0_13, %c0_14] : memref<8x8xf32, #tpu.memory_space<vmem>>, vector<8x8xf32>
      tpu.vector_store %arg5[%c0_13, %c0_14], %19 {strides = array<i32>} : memref<8x8xf32, #tpu.memory_space<vmem>>, vector<8x8xf32>,
    } else {
    }
    %cst = arith.constant 1.000000e+00 : f32
    %3 = vector.broadcast %cst : f32 to vector<8x256xf32>
    %c0 = arith.constant 0 : index
    %c0_1 = arith.constant 0 : index
    %4 = vector.load %arg3[%c0, %c0_1] : memref<8x256xf32, #tpu.memory_space<vmem>>, vector<8x256xf32>
    %cst_2 = arith.constant 9.99999997E-7 : f32
    %5 = vector.broadcast %cst_2 : f32 to vector<8x256xf32>
    %6 = arith.maximumf %4, %5 : vector<8x256xf32>
    %c0_3 = arith.constant 0 : index
    %c0_4 = arith.constant 0 : index
    %7 = memref.load %arg2[%c0_3, %c0_4] : memref<1x1xf32, #tpu.memory_space<smem>>
    %8 = math.log %6 : vector<8x256xf32>
    %9 = vector.broadcast %7 : f32 to vector<8x256xf32>
    %10 = arith.mulf %9, %8 : vector<8x256xf32>
    %11 = math.exp %10 : vector<8x256xf32>
    %c0_5 = arith.constant 0 : index
    %c0_6 = arith.constant 0 : index
    %12 = vector.load %arg5[%c0_5, %c0_6] : memref<8x8xf32, #tpu.memory_space<vmem>>, vector<8x8xf32>
    %cst_7 = arith.constant dense<0.000000e+00> : vector<8x8xf32>
    %13 = tpu.matmul %3, %11, %cst_7 {dimension_numbers = #tpu.dot_dimension_numbers<[1], [1], [0], [0], [0, 0, 1, 0], [], []>} : vector<8x256xf32>, vector<8x256xf32>, vector<8x8xf32> -> vector<8x8xf32>
    %14 = arith.addf %12, %13 : vector<8x8xf32>
    %c0_8 = arith.constant 0 : index
    %c0_9 = arith.constant 0 : index
    %15 = vector.load %arg5[%c0_8, %c0_9] : memref<8x8xf32, #tpu.memory_space<vmem>>, vector<8x8xf32>
    tpu.vector_store %arg5[%c0_8, %c0_9], %14 {strides = array<i32>} : memref<8x8xf32, #tpu.memory_space<vmem>>, vector<8x8xf32>,
    %c0_i32_10 = arith.constant 0 : i32
    %16 = arith.cmpi eq, %arg1, %c0_i32_10 : i32
    %17 = arith.extui %16 : i1 to i32
    %c0_i32_11 = arith.constant 0 : i32
    %18 = arith.cmpi ne, %17, %c0_i32_11 : i32
    scf.if %18 {
      %c0_12 = arith.constant 0 : index
      %c0_13 = arith.constant 0 : index
      %19 = vector.load %arg5[%c0_12, %c0_13] : memref<8x8xf32, #tpu.memory_space<vmem>>, vector<1x8xf32>
      %cst_14 = arith.constant 3.906250e-03 : f32
      %20 = vector.broadcast %cst_14 : f32 to vector<1x8xf32>
      %21 = arith.mulf %19, %20 : vector<1x8xf32>
      %22 = math.log %21 : vector<1x8xf32>
      %c0_15 = arith.constant 0 : index
      %c0_16 = arith.constant 0 : index
      %23 = memref.load %arg2[%c0_15, %c0_16] : memref<1x1xf32, #tpu.memory_space<smem>>
      %24 = vector.broadcast %23 : f32 to vector<1x8xf32>
      %25 = arith.divf %22, %24 : vector<1x8xf32>
      %26 = math.exp %25 : vector<1x8xf32>
      %c0_17 = arith.constant 0 : index
      %c0_18 = arith.constant 0 : index
      %27 = vector.load %arg4[%c0_17, %c0_18] : memref<1x8xf32, #tpu.memory_space<vmem>>, vector<1x8xf32>
      tpu.vector_store %arg4[%c0_17, %c0_18], %26 {strides = array<i32>} : memref<1x8xf32, #tpu.memory_space<vmem>>, vector<1x8xf32>,
    } else {
    }
    return
  }
  func.func @transform_0(%arg0: i32, %arg1: i32) -> (i32, i32) {
    %c0_i32 = arith.constant 0 : i32
    %c0_i32_0 = arith.constant 0 : i32
    %c0_i32_1 = arith.constant 0 : i32
    return %c0_i32, %c0_i32_0 : i32, i32
  }
  func.func @transform_1(%arg0: i32, %arg1: i32) -> (i32, i32) {
    %c0_i32 = arith.constant 0 : i32
    return %arg0, %arg1 : i32, i32
  }
  func.func @transform_2(%arg0: i32, %arg1: i32) -> (i32, i32) {
    %c0_i32 = arith.constant 0 : i32
    %c0_i32_0 = arith.constant 0 : i32
    return %c0_i32, %arg0 : i32, i32
  }
}

</mosaic_0001>

<llo_original>
// kernel: tpu_custom_call.1
$region0: #{tpu_custom_call.1}
  #allocation0 [shape = 'u32[]', space=smem, size = 0x4, offset = 0x4, fixed_abs, tag = 'smem constant byte address 0x4 - core index']
  #allocation1 [shape = 'u32[144,128]{1,0:T(1,128)}', space=vmem, size = 0x12000, scoped, tag = 'internal scratch']
  #allocation2 [shape = 'f32[8,8]{1,0:T(8,128)}', space=vmem, size = 0x1000, scoped, tag = 'scratch operand']
  #allocation3 [shape = 'f32[1,1]{1,0:T(1,128)S(6)}', space=smem, size = 0x200, scoped, tag = 'scoped memory for tpu_custom_call.1']
  %s0 = inlined_call_operand.<no memory space> [shape: f32[1,1], index: 0, kind: input, shape index: {}]
  %s1 = inlined_call_operand.hbm [shape: f32[8,256], index: 1, kind: input, shape index: {}]
  %s2 = inlined_call_operand.hbm [shape: f32[1,8], index: 2, kind: output, shape index: {}]
  %s3 = sld [smem:[#allocation0]]
  $region30: #{tpu_custom_call.1} parent=0
    _
  %s5 = ssub.s32 1, %s3
  %s6 = scalar_select 0, %s5, %s3
  %7 = sst [smem:[#allocation3]] %s0
  $region1: #{tpu_custom_call.1} parent=0
    #allocation4 [shape = 'u8[8192]{0}', space=vmem, size = 0x2000, scoped, tag = 'input window, operand 1, single buffered']
    #allocation5 [shape = 's32[1]{0}', space=sflag, size = 0x4, scoped, tag = 'scoped memory for tpu_custom_call.1']
    #allocation6 [shape = 's32[1]{0}', space=sflag, size = 0x4, scoped, tag = 'scoped memory for tpu_custom_call.1']
    #allocation7 [shape = 'u8[512]{0}', space=vmem, size = 0x400, scoped, tag = 'output window, operand 0, single buffered']
    %8 = vsyncpa [#allocation5], 0
    %9 = vsyncpa [#allocation6], 0
    // Predicated region
    $region2: #{tpu_custom_call.1} parent=1 // pred_check
      _
    $region3: #{tpu_custom_call.1} parent=1 // pred_check_branch
      %11 = sbr.rel (0) target = $region5
    $region4: #{tpu_custom_call.1} parent=1 // pred_region
      _
    $region5: #{tpu_custom_call.1} parent=1 // pred_fallthru
      _
    // Predicated region
    $region6: #{tpu_custom_call.1} parent=1 // pred_check
      _
    $region7: #{tpu_custom_call.1} parent=1 // pred_check_branch
      %13 = sbr.rel (0) target = $region9
    $region8: #{tpu_custom_call.1} parent=1 // pred_region
      %s15 = ssub.s32 256, 256
      %16 = vsyncadd [#allocation5], %s15
      %s18 = sshll.u32 [#allocation4], 4
      %s19 = int_to_ptr.vmem [resolvable:$true] %s18
      %21 = dma.hbm_to_vmem [thread:$0]  %s1, 256, %s19, [#allocation5]
    $region9: #{tpu_custom_call.1} parent=1 // pred_fallthru
      _
    // Predicated region
    $region10: #{tpu_custom_call.1} parent=1 // pred_check
      _
    $region11: #{tpu_custom_call.1} parent=1 // pred_check_branch
      %23 = sbr.rel (0) target = $region13
    $region12: #{tpu_custom_call.1} parent=1 // pred_region
      %24 = dma.done [#allocation5], 256
    $region13: #{tpu_custom_call.1} parent=1 // pred_fallthru
      _
    %p25 = scmp.eq.s32.totalorder 0, 0
    // Predicated region
    $region14: #{tpu_custom_call.1} parent=1 // pred_check
      %p26 = pneg %p25
    $region15: #{tpu_custom_call.1} parent=1 // pred_check_branch
      %28 = sbr.rel (%p26) target = $region17
    $region16: #{tpu_custom_call.1} parent=1 // pred_region
      %vm29 = vcmask 64512
      %30 = vst.msk [vmem:[#allocation2] sm:$0xff] %vm29, 0.0
    $region17: #{tpu_custom_call.1} parent=1 // pred_fallthru
      _
    %v31 = vld [vmem:[#allocation4] sm:$0xff]
    %v32 = vld [vmem:[#allocation4 + $0x8] sm:$0xff]
    %v33 = vmax.f32 %v31, 1e-06
    %v34 = vmax.f32 %v32, 1e-06
    %s35 = sld [smem:[#allocation3]]
    %v36 = vlog2.pop %v33
    %v37 = vmul.f32 %v36, 0.6931472
    %v38 = vlog2.pop %v34
    %v39 = vmul.f32 %v38, 0.6931472
    %v40 = vstv %s35
    %v41 = vmul.f32 %v40, %v37
    %v42 = vmul.f32 %v40, %v39
    %v43 = vmul.f32 %v41, 1.442695
    %v44 = vpow.pop %v43
    %v45 = vmul.f32 %v42, 1.442695
    %v46 = vpow.pop %v45
    %v47 = vld [vmem:[#allocation2] sm:$0xff]
    %48 = vmatprep.subr.mxu0 0.0
    %49 = vmatpush1.xpose.msra.mxu0 0.0
    %50 = vmatprep.subr.mxu0 0.0
    %51 = vmatpush1.xpose.msra.mxu0 0.0
    %52 = vmatprep.subr.mxu0 0.0
    %53 = vmatpush1.xpose.msra.mxu0 0.0
    %54 = vmatprep.subr.mxu0 0.0
    %55 = vmatpush1.xpose.msra.mxu0 0.0
    %56 = vmatprep.subr.mxu0 0.0
    %57 = vmatpush1.xpose.msra.mxu0 0.0
    %58 = vmatprep.subr.mxu0 0.0
    %59 = vmatpush1.xpose.msra.mxu0 0.0
    %60 = vmatprep.subr.mxu0 0.0
    %61 = vmatpush1.xpose.msra.mxu0 0.0
    %62 = vmatprep.subr.mxu0 0.0
    %63 = vmatpush1.xpose.msra.mxu0 0.0
    %64 = vmatprep.subr.mxu0 0.0
    %65 = vmatpush1.xpose.msra.mxu0 0.0
    %66 = vmatprep.subr.mxu0 0.0
    %67 = vmatpush1.xpose.msra.mxu0 0.0
    %68 = vmatprep.subr.mxu0 0.0
    %69 = vmatpush1.xpose.msra.mxu0 0.0
    %70 = vmatprep.subr.mxu0 0.0
    %71 = vmatpush1.xpose.msra.mxu0 0.0
    %72 = vmatprep.subr.mxu0 0.0
    %73 = vmatpush1.xpose.msra.mxu0 0.0
    %74 = vmatprep.subr.mxu0 0.0
    %75 = vmatpush1.xpose.msra.mxu0 0.0
    %76 = vmatprep.subr.mxu0 0.0
    %77 = vmatpush1.xpose.msra.mxu0 0.0
    %78 = vmatprep.subr.mxu0 %v46
    %79 = vmatpush1.xpose.msra.mxu0 %v44
    %80 = vmatprep.subr.mxu0 0.0
    %81 = vmatpush2.xpose.msra.mxu0 0.0
    %82 = vmatprep.subr.mxu0 0.0
    %83 = vmatpush2.xpose.msra.mxu0 0.0
    %84 = vmatprep.subr.mxu0 0.0
    %85 = vmatpush2.xpose.msra.mxu0 0.0
    %86 = vmatprep.subr.mxu0 0.0
    %87 = vmatpush2.xpose.msra.mxu0 0.0
    %88 = vmatprep.subr.mxu0 0.0
    %89 = vmatpush2.xpose.msra.mxu0 0.0
    %90 = vmatprep.subr.mxu0 0.0
    %91 = vmatpush2.xpose.msra.mxu0 0.0
    %92 = vmatprep.subr.mxu0 0.0
    %93 = vmatpush2.xpose.msra.mxu0 0.0
    %94 = vmatprep.subr.mxu0 0.0
    %95 = vmatpush2.xpose.msra.mxu0 0.0
    %96 = vmatprep.subr.mxu0 0.0
    %97 = vmatpush2.xpose.msra.mxu0 0.0
    %98 = vmatprep.subr.mxu0 0.0
    %99 = vmatpush2.xpose.msra.mxu0 0.0
    %100 = vmatprep.subr.mxu0 0.0
    %101 = vmatpush2.xpose.msra.mxu0 0.0
    %102 = vmatprep.subr.mxu0 0.0
    %103 = vmatpush2.xpose.msra.mxu0 0.0
    %104 = vmatprep.subr.mxu0 0.0
    %105 = vmatpush2.xpose.msra.mxu0 0.0
    %106 = vmatprep.subr.mxu0 0.0
    %107 = vmatpush2.xpose.msra.mxu0 0.0
    %108 = vmatprep.subr.mxu0 0.0
    %109 = vmatpush2.xpose.msra.mxu0 0.0
    %110 = vmatprep.subr.mxu0 0.0
    %111 = vmatpush2.xpose.msra.mxu0 0.0
    %112 = vmatprep.mubr.f32.mxu0 1.0
    %113 = vmatmul.mubr.f32.gmra.mxu0 1.0
    %v114 = vpop.f32.mrf.mxu0
    %v115 = vadd.f32 0.0, %v114
    %v116 = vpop.f32.mrf.mxu0
    %117 = vdwg.mxu0
    %v118 = vadd.f32 %v47, %v115
    %vm119 = vcmask 64512
    %120 = vst.msk [vmem:[#allocation2] sm:$0xff] %vm119, %v118
    // Predicated region
    $region18: #{tpu_custom_call.1} parent=1 // pred_check
      %p121 = pneg %p25
    $region19: #{tpu_custom_call.1} parent=1 // pred_check_branch
      %123 = sbr.rel (%p121) target = $region21
    $region20: #{tpu_custom_call.1} parent=1 // pred_region
      %v124 = vld [vmem:[#allocation2] sm:$0x1]
      %v125 = vmul.f32 %v124, 0.00390625
      %v126 = vlog2.pop %v125
      %v127 = vmul.f32 %v126, 0.6931472
      %s128 = sld [smem:[#allocation3]]
      %v129 = vstv %s128
      %v130 = vrcp.pop %v129
      %v131 = vmul.f32 %v127, %v130
      %v132 = vmul.f32 %v131, 1.442695
      %v133 = vpow.pop %v132
      %vm134 = vcmask 57344
      %135 = vst.msk [vmem:[#allocation7] sm:$0x1] %vm134, %v133
    $region21: #{tpu_custom_call.1} parent=1 // pred_fallthru
      _
    // Predicated region
    $region22: #{tpu_custom_call.1} parent=1 // pred_check
      _
    $region23: #{tpu_custom_call.1} parent=1 // pred_check_branch
      %137 = sbr.rel (0) target = $region25
    $region24: #{tpu_custom_call.1} parent=1 // pred_region
      %s139 = ssub.s32 16, 16
      %140 = vsyncadd [#allocation6], %s139
      %s142 = sshll.u32 [#allocation7], 4
      %s143 = int_to_ptr.vmem [resolvable:$true] %s142
      %145 = dma.vmem_to_hbm [thread:$0]  %s143, 16, %s2, [#allocation6]
    $region25: #{tpu_custom_call.1} parent=1 // pred_fallthru
      _
    // Predicated region
    $region26: #{tpu_custom_call.1} parent=1 // pred_check
      _
    $region27: #{tpu_custom_call.1} parent=1 // pred_check_branch
      %147 = sbr.rel (0) target = $region29
    $region28: #{tpu_custom_call.1} parent=1 // pred_region
      %148 = dma.done [#allocation6], 16
    $region29: #{tpu_custom_call.1} parent=1 // pred_fallthru
      _
    %149 = vsyncpa [#allocation5], 1
    %150 = vsyncpa [#allocation6], 1

</llo_original>
